<compile_context>
chip_gen: v6e
topology: v6e:2x2x1
jax: 0.10.0
libtpu: 0.0.40
codegen_flags: <defaults>
</compile_context>

<pallas_src>
import functools
import math

import jax
import jax.numpy as jnp
from jax.experimental import pallas as pl
from jax.experimental.pallas import tpu as pltpu


def get_padding_elem(L_in: int, stride: int, kernel_size: int, dilation: int):
    """Faithful port of the PyTorch helper."""
    if stride > 1:
        padding = [math.floor(kernel_size / 2), math.floor(kernel_size / 2)]
    else:
        L_out = math.floor((L_in - dilation * (kernel_size - 1) - 1) / stride) + 1
        padding = [math.floor((L_in - L_out) / 2), math.floor((L_in - L_out) / 2)]
    return padding


def _round_up(x: int, m: int) -> int:
    return ((x + m - 1) // m) * m


def _pick_time_tile(T, Hp, Cin_p, Cout_p, x_itemsize, out_itemsize, K,
                    vmem_budget_bytes=20 * 1024 * 1024):
    """Largest Hp-multiple time tile that keeps per-grid-step VMEM bounded."""
    # Fixed VMEM (independent of the time tile): resident weights/bias + halo bufs.
    fixed = (2 * K * Cin_p * Cout_p * x_itemsize   # weight (double-buffered)
             + 2 * Cout_p * 4                      # bias
             + 2 * Hp * Cin_p * x_itemsize)        # halo block (double-buffered)
    # VMEM per output row: x main (2 bufs) + out (2 bufs) + stitch scratch + f32 acc.
    per_row = (2 * Cin_p * x_itemsize + 2 * Cout_p * out_itemsize
               + Cin_p * x_itemsize + Cout_p * 4)
    cap = _round_up(T, Hp)
    tt = Hp
    while (tt * 2 <= cap and tt * 2 <= 8192
           and fixed + (tt * 2) * per_row <= vmem_budget_bytes):
        tt *= 2
    return tt


def _conv1d_kernel(x_ref, xh_ref, w_ref, b_ref, o_ref, xt_ref, *acc_scratch,
                   kernel_size: int, dilation: int):
    # x_ref : (1, Tt, Cin_p)     main time window of the padded input
    # xh_ref: (1, Hp, Cin_p)     right halo (rows just after the main window)
    # w_ref : (K, Cin_p, Cout_p) tap-major weights (resident across the grid)
    # b_ref : (1, Cout_p)        f32 bias
    # o_ref : (1, Tt, Cout_p)    output window
    # xt_ref: (Tt+Hp, Cin_p)     VMEM scratch: main tile + halo stitched together
    # acc_scratch: optional (Tt, Cout_p) f32 accumulator (only when out dtype != f32)
    Tt = o_ref.shape[1]
    Hp = xh_ref.shape[1]
    K = kernel_size

    # Stitch the contiguous (Tt + Hp) input window once per grid step.
    xt_ref[pl.ds(0, Tt), :] = x_ref[0]
    xt_ref[pl.ds(Tt, Hp), :] = xh_ref[0]

    # One MXU matmul per tap over the full (padded) Cin contraction.  K is small
    # and static, so the Python loop is fully unrolled.
    # TODO(synk): for very small Cin, fold taps into one (Tt, K*Cin)@(K*Cin, Cout)
    # im2col matmul instead of padding Cin to 128.
    def tap(k):
        return jnp.dot(xt_ref[pl.ds(k * dilation, Tt), :], w_ref[k],
                       preferred_element_type=jnp.float32)

    if acc_scratch:
        # Non-f32 output: accumulate in an explicit f32 scratch, cast once.
        acc_ref = acc_scratch[0]
        acc_ref[...] = tap(0) + b_ref[...]          # bias folded into tap-0 init
        for k in range(1, K):
            acc_ref[...] += tap(k)
        o_ref[0] = acc_ref[...].astype(o_ref.dtype)
    else:
        # f32 output: accumulate directly in the output VMEM block
        # (saves the final acc->out copy per grid step).
        o_ref[0] = tap(0) + b_ref[...]
        for k in range(1, K):
            o_ref[0] += tap(k)


def conv1d_same(x, weight, bias, *, kernel_size: int, dilation: int = 1,
                stride: int = 1, padding_mode: str = "reflect",
                compute_dtype=None, time_tile=None):
    """x: (batch, time, channel). weight: (Cout, Cin, K) torch layout. bias: (Cout,)."""
    # TODO(synk): stride>1 (decimated output), groups>1 and 'causal'/'valid'
    # padding variants are not implemented (module defaults only).
    assert stride == 1, "stride=1 only"
    assert padding_mode == "reflect", "reflect padding only (module default)"
    B, T, Cin = x.shape
    Cout, Cin_w, K = weight.shape
    assert Cin_w == Cin and K == kernel_size
    if K % 2 == 0:
        # The PyTorch module only accepts odd kernels; even K would also make the
        # symmetric 'same' padding below read out of bounds in the kernel.
        raise ValueError(f"kernel_size must be odd, got {K}")
    if bias is None:
        bias = jnp.zeros((Cout,), jnp.float32)

    # 'same' padding.  (The module passes in_channels as L_in — a SpeechBrain
    # quirk — but for stride=1 the result is length-independent:
    # floor(dilation*(K-1)/2) on each side, so semantics are preserved.)
    pad_l, pad_r = get_padding_elem(T, stride, K, dilation)
    halo = pad_l + pad_r                       # == dilation * (K - 1) for odd K
    if pad_l > T - 1:
        raise ValueError(
            f"reflect padding requires dilation*(K-1)//2 <= T-1 (pad={pad_l}, T={T})")

    out_dtype = jnp.dtype(x.dtype)
    cdt = jnp.dtype(compute_dtype) if compute_dtype is not None else jnp.dtype(x.dtype)
    x = x.astype(cdt)
    weight = weight.astype(cdt)

    # Lane-dense channel padding (zero channels contribute exactly 0).
    Cin_p = _round_up(Cin, 128)
    Cout_p = _round_up(Cout, 128)
    x_itemsize = cdt.itemsize
    out_itemsize = out_dtype.itemsize
    # Sublane quantum: f32 -> 8, bf16 -> 16, 8-bit -> 32 (keeps halo/tile blocks
    # on native tile boundaries for sub-32-bit streaming).
    sub = max(8, 32 // x_itemsize)
    # Halo rows, rounded up so the halo block stays aligned.
    Hp = _round_up(max(halo, 1), sub)

    if time_tile is None:
        Tt = _pick_time_tile(T, Hp, Cin_p, Cout_p, x_itemsize, out_itemsize, K)
    else:
        Tt = _round_up(int(time_tile), Hp)
    nT = -(-T // Tt)
    Tp_total = nT * Tt + Hp                    # padded time extent seen by kernel
    step = Tt // Hp                            # halo block index stride

    # Reflect-pad time, then zero-pad time tail + channels to the tiled extents.
    # TODO(synk): the reflect pad is still a separate HBM pass; it could be fused
    # into the kernel by reflecting the first/last tile's halo rows in-kernel.
    x_pad = jnp.pad(x, ((0, 0), (pad_l, pad_r), (0, 0)), mode="reflect")
    x_pad = jnp.pad(x_pad, ((0, 0), (0, Tp_total - (T + halo)), (0, Cin_p - Cin)))

    w = jnp.transpose(weight, (2, 1, 0))                      # (K, Cin, Cout)
    w = jnp.pad(w, ((0, 0), (0, Cin_p - Cin), (0, Cout_p - Cout)))
    b = jnp.pad(bias.astype(jnp.float32), (0, Cout_p - Cout)).reshape(1, Cout_p)

    direct_acc = out_dtype == jnp.float32
    scratch_shapes = [pltpu.VMEM((Tt + Hp, Cin_p), x_pad.dtype)]   # stitched window
    if not direct_acc:
        scratch_shapes.append(pltpu.VMEM((Tt, Cout_p), jnp.float32))  # f32 accumulator

    cost = pl.CostEstimate(
        flops=int(2 * B * nT * Tt * K * Cin_p * Cout_p),
        transcendentals=0,
        bytes_accessed=int(x_pad.size * x_itemsize + w.size * x_itemsize
                           + b.size * 4 + B * nT * Tt * Cout_p * out_itemsize),
    )

    out = pl.pallas_call(
        functools.partial(_conv1d_kernel, kernel_size=K, dilation=dilation),
        out_shape=jax.ShapeDtypeStruct((B, nT * Tt, Cout_p), out_dtype),
        grid_spec=pltpu.PrefetchScalarGridSpec(
            num_scalar_prefetch=0,
            grid=(B, nT),
            in_specs=[
                # Main (Tt, Cin_p) time window for this (batch, tile).
                pl.BlockSpec((1, Tt, Cin_p), lambda bi, ti: (bi, ti, 0)),
                # Right halo: the Hp rows immediately after the main window.
                # Tt is a multiple of Hp, so plain blocked indexing suffices.
                pl.BlockSpec((1, Hp, Cin_p), lambda bi, ti: (bi, (ti + 1) * step, 0)),
                # Weights / bias: small, constant index_map -> resident across grid.
                pl.BlockSpec((K, Cin_p, Cout_p), lambda bi, ti: (0, 0, 0)),
                pl.BlockSpec((1, Cout_p), lambda bi, ti: (0, 0)),
            ],
            out_specs=pl.BlockSpec((1, Tt, Cout_p), lambda bi, ti: (bi, ti, 0)),
            scratch_shapes=scratch_shapes,
        ),
        compiler_params=pltpu.CompilerParams(
            # Every (batch, time-tile) block is independent -> both axes parallel
            # (lets v7x shard the grid across its two TensorCores).
            dimension_semantics=("parallel", "parallel"),
            vmem_limit_bytes=32 * 1024 * 1024,
        ),
        cost_estimate=cost,
    )(x_pad, x_pad, w, b)

    return out[:, :T, :Cout]


def _reference_conv1d_same(x, weight, bias, *, kernel_size, dilation=1):
    """Plain-JAX reference mirroring the PyTorch forward (for correctness check)."""
    T = x.shape[1]
    pad_l, pad_r = get_padding_elem(T, 1, kernel_size, dilation)
    x_pad = jnp.pad(x, ((0, 0), (pad_l, pad_r), (0, 0)), mode="reflect")
    out = jax.lax.conv_general_dilated(
        x_pad, jnp.transpose(weight, (2, 1, 0)),              # (K, Cin, Cout)
        window_strides=(1,), padding="VALID", rhs_dilation=(dilation,),
        dimension_numbers=("NWC", "WIO", "NWC"),
    )
    return out + bias[None, None, :]


if __name__ == "__main__":
    key = jax.random.PRNGKey(0)

    # Test 1: tiny default-config shapes (batch, time, channel).
    B, T, Cin, Cout, K = 2, 16, 4, 8, 3
    k1, k2, k3, key = jax.random.split(key, 4)
    x = jax.random.normal(k1, (B, T, Cin), dtype=jnp.float32)
    bound = 1.0 / math.sqrt(Cin * K)
    weight = jax.random.uniform(k2, (Cout, Cin, K), minval=-bound, maxval=bound,
                                dtype=jnp.float32)
    bias = jax.random.uniform(k3, (Cout,), minval=-bound, maxval=bound,
                              dtype=jnp.float32)

    out = jax.block_until_ready(conv1d_same(x, weight, bias, kernel_size=K))
    ref = _reference_conv1d_same(x, weight, bias, kernel_size=K)
    assert out.shape == (B, T, Cout)
    assert jnp.allclose(out, ref, atol=1e-3, rtol=1e-3), "test1 mismatch vs reference"

    # Test 2: exercises time tiling + halo (multiple tiles), dilation, and
    # non-multiple-of-128 channel padding / output slicing.
    B2, T2, Cin2, Cout2, K2, dil2 = 2, 200, 24, 40, 5, 2
    k1, k2, k3, key = jax.random.split(key, 4)
    x2 = jax.random.normal(k1, (B2, T2, Cin2), dtype=jnp.float32)
    bound2 = 1.0 / math.sqrt(Cin2 * K2)
    weight2 = jax.random.uniform(k2, (Cout2, Cin2, K2), minval=-bound2,
                                 maxval=bound2, dtype=jnp.float32)
    bias2 = jax.random.uniform(k3, (Cout2,), minval=-bound2, maxval=bound2,
                               dtype=jnp.float32)

    out2 = jax.block_until_ready(
        conv1d_same(x2, weight2, bias2, kernel_size=K2, dilation=dil2, time_tile=64))
    ref2 = _reference_conv1d_same(x2, weight2, bias2, kernel_size=K2, dilation=dil2)
    assert out2.shape == (B2, T2, Cout2)
    assert jnp.allclose(out2, ref2, atol=5e-3, rtol=5e-3), "test2 mismatch vs reference"

    print("KERNEL_OK")
</pallas_src>

<mosaic_0001>
module attributes {stable_mosaic.version = 11 : i64} {
  func.func @_conv1d_kernel(%arg0: i32, %arg1: i32, %arg2: memref<1x16x128xf32, #tpu.memory_space<vmem>>, %arg3: memref<1x8x128xf32, #tpu.memory_space<vmem>>, %arg4: memref<3x128x128xf32, #tpu.memory_space<vmem>>, %arg5: memref<1x128xf32, #tpu.memory_space<vmem>>, %arg6: memref<1x16x128xf32, #tpu.memory_space<vmem>>, %arg7: memref<24x128xf32, #tpu.memory_space<vmem>>) attributes {dimension_semantics = [#tpu.dimension_semantics<parallel>, #tpu.dimension_semantics<parallel>], iteration_bounds = array<i64: 2, 1>, scalar_prefetch = 0 : i64, scratch_operands = 1 : i64, tpu.core_type = #tpu.core_type<tc>, window_params = [{transform_indices = @transform_0, window_bounds = array<i64: 1, 16, 128>}, {transform_indices = @transform_1, window_bounds = array<i64: 1, 8, 128>}, {pipeline_mode = #tpu.pipeline_mode<synchronous>, transform_indices = @transform_2, window_bounds = array<i64: 3, 128, 128>}, {pipeline_mode = #tpu.pipeline_mode<synchronous>, transform_indices = @transform_3, window_bounds = array<i64: 1, 128>}, {transform_indices = @transform_4, window_bounds = array<i64: 1, 16, 128>}]} {
    %c0 = arith.constant 0 : index
    %c0_0 = arith.constant 0 : index
    %c0_1 = arith.constant 0 : index
    %0 = vector.load %arg2[%c0, %c0_0, %c0_1] : memref<1x16x128xf32, #tpu.memory_space<vmem>>, vector<1x16x128xf32>
    %1 = vector.shape_cast %0 : vector<1x16x128xf32> to vector<16x128xf32>
    %c0_2 = arith.constant 0 : index
    %c0_3 = arith.constant 0 : index
    %2 = vector.load %arg7[%c0_2, %c0_3] : memref<24x128xf32, #tpu.memory_space<vmem>>, vector<16x128xf32>
    tpu.vector_store %arg7[%c0_2, %c0_3], %1 {strides = array<i32>} : memref<24x128xf32, #tpu.memory_space<vmem>>, vector<16x128xf32>,
    %c0_4 = arith.constant 0 : index
    %c0_5 = arith.constant 0 : index
    %c0_6 = arith.constant 0 : index
    %3 = vector.load %arg3[%c0_4, %c0_5, %c0_6] : memref<1x8x128xf32, #tpu.memory_space<vmem>>, vector<1x8x128xf32>
    %4 = vector.shape_cast %3 : vector<1x8x128xf32> to vector<8x128xf32>
    %c16 = arith.constant 16 : index
    %c0_7 = arith.constant 0 : index
    %5 = vector.load %arg7[%c16, %c0_7] : memref<24x128xf32, #tpu.memory_space<vmem>>, vector<8x128xf32>
    tpu.vector_store %arg7[%c16, %c0_7], %4 {strides = array<i32>} : memref<24x128xf32, #tpu.memory_space<vmem>>, vector<8x128xf32>,
    %c0_8 = arith.constant 0 : index
    %c0_9 = arith.constant 0 : index
    %6 = vector.load %arg7[%c0_8, %c0_9] : memref<24x128xf32, #tpu.memory_space<vmem>>, vector<16x128xf32>
    %c0_10 = arith.constant 0 : index
    %c0_11 = arith.constant 0 : index
    %c0_12 = arith.constant 0 : index
    %7 = vector.load %arg4[%c0_10, %c0_11, %c0_12] : memref<3x128x128xf32, #tpu.memory_space<vmem>>, vector<1x128x128xf32>
    %8 = vector.shape_cast %7 : vector<1x128x128xf32> to vector<128x128xf32>
    %cst = arith.constant dense<0.000000e+00> : vector<16x128xf32>
    %9 = tpu.matmul %6, %8, %cst {dimension_numbers = #tpu.dot_dimension_numbers<[1], [0], [0], [1], [0, 0, 1, 1], [], []>} : vector<16x128xf32>, vector<128x128xf32>, vector<16x128xf32> -> vector<16x128xf32>
    %c0_13 = arith.constant 0 : index
    %c0_14 = arith.constant 0 : index
    %10 = vector.load %arg5[%c0_13, %c0_14] : memref<1x128xf32, #tpu.memory_space<vmem>>, vector<1x128xf32>
    %11 = vector.broadcast %10 : vector<1x128xf32> to vector<16x128xf32>
    %12 = arith.addf %9, %11 : vector<16x128xf32>
    %c0_15 = arith.constant 0 : index
    %c0_16 = arith.constant 0 : index
    %c0_17 = arith.constant 0 : index
    %13 = vector.load %arg6[%c0_15, %c0_16, %c0_17] : memref<1x16x128xf32, #tpu.memory_space<vmem>>, vector<1x16x128xf32>
    %14 = vector.shape_cast %13 : vector<1x16x128xf32> to vector<16x128xf32>
    %15 = vector.shape_cast %12 : vector<16x128xf32> to vector<1x16x128xf32>
    tpu.vector_store %arg6[%c0_15, %c0_16, %c0_17], %15 {strides = array<i32>} : memref<1x16x128xf32, #tpu.memory_space<vmem>>, vector<1x16x128xf32>,
    %c0_18 = arith.constant 0 : index
    %c0_19 = arith.constant 0 : index
    %c0_20 = arith.constant 0 : index
    %16 = vector.load %arg6[%c0_18, %c0_19, %c0_20] : memref<1x16x128xf32, #tpu.memory_space<vmem>>, vector<1x16x128xf32>
    %17 = vector.shape_cast %16 : vector<1x16x128xf32> to vector<16x128xf32>
    %c1 = arith.constant 1 : index
    %c0_21 = arith.constant 0 : index
    %18 = vector.load %arg7[%c1, %c0_21] : memref<24x128xf32, #tpu.memory_space<vmem>>, vector<16x128xf32>
    %c1_22 = arith.constant 1 : index
    %c0_23 = arith.constant 0 : index
    %c0_24 = arith.constant 0 : index
    %19 = vector.load %arg4[%c1_22, %c0_23, %c0_24] : memref<3x128x128xf32, #tpu.memory_space<vmem>>, vector<1x128x128xf32>
    %20 = vector.shape_cast %19 : vector<1x128x128xf32> to vector<128x128xf32>
    %cst_25 = arith.constant dense<0.000000e+00> : vector<16x128xf32>
    %21 = tpu.matmul %18, %20, %cst_25 {dimension_numbers = #tpu.dot_dimension_numbers<[1], [0], [0], [1], [0, 0, 1, 1], [], []>} : vector<16x128xf32>, vector<128x128xf32>, vector<16x128xf32> -> vector<16x128xf32>
    %22 = arith.addf %17, %21 : vector<16x128xf32>
    %c0_26 = arith.constant 0 : index
    %c0_27 = arith.constant 0 : index
    %c0_28 = arith.constant 0 : index
    %23 = vector.load %arg6[%c0_26, %c0_27, %c0_28] : memref<1x16x128xf32, #tpu.memory_space<vmem>>, vector<1x16x128xf32>
    %24 = vector.shape_cast %23 : vector<1x16x128xf32> to vector<16x128xf32>
    %25 = vector.shape_cast %22 : vector<16x128xf32> to vector<1x16x128xf32>
    tpu.vector_store %arg6[%c0_26, %c0_27, %c0_28], %25 {strides = array<i32>} : memref<1x16x128xf32, #tpu.memory_space<vmem>>, vector<1x16x128xf32>,
    %c0_29 = arith.constant 0 : index
    %c0_30 = arith.constant 0 : index
    %c0_31 = arith.constant 0 : index
    %26 = vector.load %arg6[%c0_29, %c0_30, %c0_31] : memref<1x16x128xf32, #tpu.memory_space<vmem>>, vector<1x16x128xf32>
    %27 = vector.shape_cast %26 : vector<1x16x128xf32> to vector<16x128xf32>
    %c2 = arith.constant 2 : index
    %c0_32 = arith.constant 0 : index
    %28 = vector.load %arg7[%c2, %c0_32] : memref<24x128xf32, #tpu.memory_space<vmem>>, vector<16x128xf32>
    %c2_33 = arith.constant 2 : index
    %c0_34 = arith.constant 0 : index
    %c0_35 = arith.constant 0 : index
    %29 = vector.load %arg4[%c2_33, %c0_34, %c0_35] : memref<3x128x128xf32, #tpu.memory_space<vmem>>, vector<1x128x128xf32>
    %30 = vector.shape_cast %29 : vector<1x128x128xf32> to vector<128x128xf32>
    %cst_36 = arith.constant dense<0.000000e+00> : vector<16x128xf32>
    %31 = tpu.matmul %28, %30, %cst_36 {dimension_numbers = #tpu.dot_dimension_numbers<[1], [0], [0], [1], [0, 0, 1, 1], [], []>} : vector<16x128xf32>, vector<128x128xf32>, vector<16x128xf32> -> vector<16x128xf32>
    %32 = arith.addf %27, %31 : vector<16x128xf32>
    %c0_37 = arith.constant 0 : index
    %c0_38 = arith.constant 0 : index
    %c0_39 = arith.constant 0 : index
    %33 = vector.load %arg6[%c0_37, %c0_38, %c0_39] : memref<1x16x128xf32, #tpu.memory_space<vmem>>, vector<1x16x128xf32>
    %34 = vector.shape_cast %33 : vector<1x16x128xf32> to vector<16x128xf32>
    %35 = vector.shape_cast %32 : vector<16x128xf32> to vector<1x16x128xf32>
    tpu.vector_store %arg6[%c0_37, %c0_38, %c0_39], %35 {strides = array<i32>} : memref<1x16x128xf32, #tpu.memory_space<vmem>>, vector<1x16x128xf32>,
    return
  }
  func.func @transform_0(%arg0: i32, %arg1: i32) -> (i32, i32, i32) {
    %c0_i32 = arith.constant 0 : i32
    %c0_i32_0 = arith.constant 0 : i32
    return %arg0, %arg1, %c0_i32 : i32, i32, i32
  }
  func.func @transform_1(%arg0: i32, %arg1: i32) -> (i32, i32, i32) {
    %c1_i32 = arith.constant 1 : i32
    %0 = arith.addi %arg1, %c1_i32 : i32
    %c2_i32 = arith.constant 2 : i32
    %1 = arith.muli %0, %c2_i32 : i32
    %c0_i32 = arith.constant 0 : i32
    %c0_i32_0 = arith.constant 0 : i32
    return %arg0, %1, %c0_i32 : i32, i32, i32
  }
  func.func @transform_2(%arg0: i32, %arg1: i32) -> (i32, i32, i32) {
    %c0_i32 = arith.constant 0 : i32
    %c0_i32_0 = arith.constant 0 : i32
    %c0_i32_1 = arith.constant 0 : i32
    %c0_i32_2 = arith.constant 0 : i32
    return %c0_i32, %c0_i32_0, %c0_i32_1 : i32, i32, i32
  }
  func.func @transform_3(%arg0: i32, %arg1: i32) -> (i32, i32) {
    %c0_i32 = arith.constant 0 : i32
    %c0_i32_0 = arith.constant 0 : i32
    %c0_i32_1 = arith.constant 0 : i32
    return %c0_i32, %c0_i32_0 : i32, i32
  }
  func.func @transform_4(%arg0: i32, %arg1: i32) -> (i32, i32, i32) {
    %c0_i32 = arith.constant 0 : i32
    %c0_i32_0 = arith.constant 0 : i32
    return %arg0, %arg1, %c0_i32 : i32, i32, i32
  }
}

</mosaic_0001>

<llo_original>
// kernel: tpu_custom_call.1
$region0: #{tpu_custom_call.1}
  #allocation0 [shape = 'u32[]', space=smem, size = 0x4, offset = 0x4, fixed_abs, tag = 'smem constant byte address 0x4 - core index']
  #allocation1 [shape = 'u32[144,128]{1,0:T(1,128)}', space=vmem, size = 0x12000, scoped, tag = 'internal scratch']
  #allocation2 [shape = 'f32[24,128]{1,0:T(8,128)}', space=vmem, size = 0x3000, scoped, tag = 'scratch operand']
  %s0 = inlined_call_operand.hbm [shape: f32[2,24,128], index: 0, kind: input, shape index: {}]
  %s1 = inlined_call_operand.hbm [shape: f32[2,24,128], index: 1, kind: input, shape index: {}]
  %s2 = inlined_call_operand.hbm [shape: f32[3,128,128], index: 2, kind: input, shape index: {}]
  %s3 = inlined_call_operand.vmem [shape: f32[1,128], index: 3, kind: input, shape index: {}]
  %s4 = inlined_call_operand.hbm [shape: f32[2,16,128], index: 4, kind: output, shape index: {}]
  %s5 = sld [smem:[#allocation0]]
  $region61: #{tpu_custom_call.1} parent=0
    _
  %s7 = ssub.s32 1, %s5
  %s8 = scalar_select 0, %s7, %s5
  $region1: #{tpu_custom_call.1} parent=0
    #allocation3 [shape = 'u8[16384]{0}', space=vmem, size = 0x4000, scoped, tag = 'input window, operand 0']
    #allocation4 [shape = 's32[2]{0}', space=sflag, size = 0x8, scoped, tag = 'scoped memory for tpu_custom_call.1']
    #allocation5 [shape = 's32[2]{0}', space=sflag, size = 0x8, scoped, tag = 'scoped memory for tpu_custom_call.1']
    #allocation6 [shape = 'u8[8192]{0}', space=vmem, size = 0x2000, scoped, tag = 'input window, operand 1']
    #allocation7 [shape = 's32[2]{0}', space=sflag, size = 0x8, scoped, tag = 'scoped memory for tpu_custom_call.1']
    #allocation8 [shape = 'u8[196608]{0}', space=vmem, size = 0x30000, scoped, tag = 'input window, operand 2, single buffered']
    #allocation9 [shape = 'u8[16384]{0}', space=vmem, size = 0x4000, scoped, tag = 'output window, operand 0']
    %9 = vsyncpa [#allocation4], 0
    %s10 = scalar_lea.sflag [#allocation4], 1
    %11 = vsyncpa %s10, 0
    %12 = vsyncpa [#allocation7], 0
    %s13 = scalar_lea.sflag [#allocation7], 1
    %14 = vsyncpa %s13, 0
    %15 = vsyncpa [#allocation5], 0
    %s16 = scalar_lea.sflag [#allocation5], 1
    %17 = vsyncpa %s16, 0
    loop: start=0, step=1, limit=4
    $region2: #{tpu_custom_call.1} parent=1 // loop_pre_header
      _
    $region3: #{tpu_custom_call.1} parent=1 // loop_header
      %s19 = sphi 0, %s23
      %p20 = scmp.ge.s32.totalorder %s19, 4
      %s26 = sphi 0, %s38
      %s27 = sphi 0, %s34
      %s28 = sphi 0, %s26
      %s29 = sphi 0, %s27
      %s30 = sphi 0, %s28
      %s31 = sphi 0, %s29
      %s43 = sphi 0, %s45
      %s46 = sphi 0, %s43
      %s47 = sphi 0, %s46
      %s63 = sphi 0, %s47
      %s75 = sphi 0, %s77
      %s78 = sphi 0, %s75
      %s79 = sphi 0, %s78
      %s95 = sphi 0, %s79
      %s99 = sphi 0, %s99
      %s101 = sphi 0, %s99
      %s102 = sphi 0, %s101
      %s116 = sphi 0, %s102
      %s120 = sphi 0, %s120
      %s122 = sphi 0, %s120
      %s123 = sphi 0, %s122
      %s137 = sphi 0, %s123
      %s145 = sphi 0, %s147
      %s148 = sphi 0, %s145
      %s149 = sphi 0, %s148
      %s165 = sphi 0, %s149
    $region4: #{tpu_custom_call.1} parent=1 // loop_header_branch
      %22 = sbr.rel (%p20) target = $region8
    $region5: #{tpu_custom_call.1} parent=1 // loop_body
      %s24 = ssub.s32 %s19, 1
      %s25 = ssub.s32 %s19, 2
      %s32 = sadd.s32 1, %s27
      %p33 = scmp.ge.s32.totalorder %s32, 1
      %s34 = scalar_select %p33, 0, %s32
      %s35 = sadd.s32 1, %s26
      %s36 = scalar_select %p33, %s35, %s26
      %p37 = scmp.ge.s32.totalorder %s36, 2
      %s38 = scalar_select %p37, 0, %s36
      %s39 = ssub.s32 %s26, %s38
      %s40 = ssub.s32 %s27, %s34
      %s41 = sor.u32 %s39, %s40
      %p42 = scmp.eq.s32.totalorder %s41, 0
      %s44 = sadd.s32 %s43, 1
      %s45 = scalar_select %p42, %s43, %s44
      %p48 = pneg %p42
      %p49 = scmp.eq.s32.totalorder %s19, 1
      %p50 = por %p48, %p49
      %p51 = scmp.ne.s32.totalorder %s43, %s46
      %p52 = scmp.eq.s32.totalorder %s19, 0
      %p53 = por %p51, %p52
      %p54 = scmp.ne.s32.totalorder %s43, %s46
      %p55 = scmp.eq.s32.totalorder %s24, 1
      %p56 = por %p54, %p55
      %p57 = scmp.ne.s32.totalorder %s46, %s47
      %p58 = scmp.eq.s32.totalorder %s24, 0
      %p59 = por %p57, %p58
      %p60 = scmp.ne.s32.totalorder %s46, %s47
      %p61 = scmp.eq.s32.totalorder %s25, 1
      %p62 = por %p60, %p61
      %p64 = scmp.ne.s32.totalorder %s47, %s63
      %p65 = scmp.eq.s32.totalorder %s25, 0
      %p66 = por %p64, %p65
      %s67 = sadd.s32 %s27, 1
      %s68 = smul.u32 %s67, 2
      %s69 = sadd.s32 %s34, 1
      %s70 = smul.u32 %s69, 2
      %s71 = ssub.s32 %s26, %s38
      %s72 = ssub.s32 %s68, %s70
      %s73 = sor.u32 %s71, %s72
      %p74 = scmp.eq.s32.totalorder %s73, 0
      %s76 = sadd.s32 %s75, 1
      %s77 = scalar_select %p74, %s75, %s76
      %p80 = pneg %p74
      %p81 = scmp.eq.s32.totalorder %s19, 1
      %p82 = por %p80, %p81
      %p83 = scmp.ne.s32.totalorder %s75, %s78
      %p84 = scmp.eq.s32.totalorder %s19, 0
      %p85 = por %p83, %p84
      %p86 = scmp.ne.s32.totalorder %s75, %s78
      %p87 = scmp.eq.s32.totalorder %s24, 1
      %p88 = por %p86, %p87
      %p89 = scmp.ne.s32.totalorder %s78, %s79
      %p90 = scmp.eq.s32.totalorder %s24, 0
      %p91 = por %p89, %p90
      %p92 = scmp.ne.s32.totalorder %s78, %s79
      %p93 = scmp.eq.s32.totalorder %s25, 1
      %p94 = por %p92, %p93
      %p96 = scmp.ne.s32.totalorder %s79, %s95
      %p97 = scmp.eq.s32.totalorder %s25, 0
      %p98 = por %p96, %p97
      %s100 = sadd.s32 %s99, 1
      %p103 = scmp.eq.s32.totalorder %s19, 1
      %p104 = scmp.ne.s32.totalorder %s99, %s101
      %p105 = scmp.eq.s32.totalorder %s19, 0
      %p106 = por %p104, %p105
      %p107 = scmp.ne.s32.totalorder %s99, %s101
      %p108 = scmp.eq.s32.totalorder %s24, 1
      %p109 = por %p107, %p108
      %p110 = scmp.ne.s32.totalorder %s101, %s102
      %p111 = scmp.eq.s32.totalorder %s24, 0
      %p112 = por %p110, %p111
      %p113 = scmp.ne.s32.totalorder %s101, %s102
      %p114 = scmp.eq.s32.totalorder %s25, 1
      %p115 = por %p113, %p114
      %p117 = scmp.ne.s32.totalorder %s102, %s116
      %p118 = scmp.eq.s32.totalorder %s25, 0
      %p119 = por %p117, %p118
      %s121 = sadd.s32 %s120, 1
      %p124 = scmp.eq.s32.totalorder %s19, 1
      %p125 = scmp.ne.s32.totalorder %s120, %s122
      %p126 = scmp.eq.s32.totalorder %s19, 0
      %p127 = por %p125, %p126
      %p128 = scmp.ne.s32.totalorder %s120, %s122
      %p129 = scmp.eq.s32.totalorder %s24, 1
      %p130 = por %p128, %p129
      %p131 = scmp.ne.s32.totalorder %s122, %s123
      %p132 = scmp.eq.s32.totalorder %s24, 0
      %p133 = por %p131, %p132
      %p134 = scmp.ne.s32.totalorder %s122, %s123
      %p135 = scmp.eq.s32.totalorder %s25, 1
      %p136 = por %p134, %p135
      %p138 = scmp.ne.s32.totalorder %s123, %s137
      %p139 = scmp.eq.s32.totalorder %s25, 0
      %p140 = por %p138, %p139
      %s141 = ssub.s32 %s26, %s38
      %s142 = ssub.s32 %s27, %s34
      %s143 = sor.u32 %s141, %s142
      %p144 = scmp.eq.s32.totalorder %s143, 0
      %s146 = sadd.s32 %s145, 1
      %s147 = scalar_select %p144, %s145, %s146
      %p150 = pneg %p144
      %p151 = scmp.eq.s32.totalorder %s19, 1
      %p152 = por %p150, %p151
      %p153 = scmp.ne.s32.totalorder %s145, %s148
      %p154 = scmp.eq.s32.totalorder %s19, 0
      %p155 = por %p153, %p154
      %p156 = scmp.ne.s32.totalorder %s145, %s148
      %p157 = scmp.eq.s32.totalorder %s24, 1
      %p158 = por %p156, %p157
      %p159 = scmp.ne.s32.totalorder %s148, %s149
      %p160 = scmp.eq.s32.totalorder %s24, 0
      %p161 = por %p159, %p160
      %p162 = scmp.ne.s32.totalorder %s148, %s149
      %p163 = scmp.eq.s32.totalorder %s25, 1
      %p164 = por %p162, %p163
      %p166 = scmp.ne.s32.totalorder %s149, %s165
      %p167 = scmp.eq.s32.totalorder %s25, 0
      %p168 = por %p166, %p167
      %p169 = scmp.le.s32.totalorder 1, %s19
      %p170 = scmp.lt.s32.totalorder %s19, 3
      %p171 = pnand %p169, %p170
      %p172 = pneg %p171
      // Predicated region
      $region9: #{tpu_custom_call.1} parent=5 // pred_check
        _
      $region10: #{tpu_custom_call.1} parent=5 // pred_check_branch
        %174 = sbr.rel (%p171) target = $region12
      $region11: #{tpu_custom_call.1} parent=5 // pred_region
        %s175 = ssub.s32 %s19, 1
        // Predicated region
        $region13: #{tpu_custom_call.1} parent=11 // pred_check
          %p176 = pneg %p112
        $region14: #{tpu_custom_call.1} parent=11 // pred_check_branch
          %178 = sbr.rel (%p176) target = $region16
        $region15: #{tpu_custom_call.1} parent=11 // pred_region
          %s180 = ssub.s32 6144, 6144
          %181 = vsyncadd [#allocation7], %s180
          %s182 = sshll.u32 [#allocation8], 4
          %s183 = int_to_ptr.vmem [resolvable:$true] %s182
          %188 = dma.hbm_to_vmem [thread:$0]  %s2, 6144, %s183, [#allocation7], 128, 128, 8
        $region16: #{tpu_custom_call.1} parent=11 // pred_fallthru
          _
        // Predicated region
        $region17: #{tpu_custom_call.1} parent=11 // pred_check
          %p189 = pneg %p133
        $region18: #{tpu_custom_call.1} parent=11 // pred_check_branch
          %191 = sbr.rel (%p189) target = $region20
        $region19: #{tpu_custom_call.1} parent=11 // pred_region
          _
        $region20: #{tpu_custom_call.1} parent=11 // pred_fallthru
          _
      $region12: #{tpu_custom_call.1} parent=5 // pred_fallthru
        _
      %p192 = scmp.lt.s32.totalorder %s19, 2
      // Predicated region
      $region21: #{tpu_custom_call.1} parent=5 // pred_check
        %p193 = pneg %p192
      $region22: #{tpu_custom_call.1} parent=5 // pred_check_branch
        %195 = sbr.rel (%p193) target = $region24
      $region23: #{tpu_custom_call.1} parent=5 // pred_region
        // Predicated region
        $region25: #{tpu_custom_call.1} parent=23 // pred_check
          %p196 = pneg %p53
        $region26: #{tpu_custom_call.1} parent=23 // pred_check_branch
          %198 = sbr.rel (%p196) target = $region28
        $region27: #{tpu_custom_call.1} parent=23 // pred_region
          %s199 = sand.u32 %s43, 1
          %s200 = scalar_lea.sflag [#allocation4], %s199
          %s201 = sand.u32 %s43, 1
          %s202 = smul.addr %s201, 16
          %s203 = scalar_lea.vmem [#allocation3], %s202
          %s204 = smul.u32 2, %s27
          %s205 = ssub.s32 3, %s204
          %p206 = scmp.lt.s32.totalorder %s205, 2
          %s207 = scalar_select %p206, %s205, 2
          %s208 = smul.u32 128, %s207
          %s210 = ssub.s32 256, %s208
          %211 = vsyncadd %s200, %s210
          %p212 = scmp.ne.s32.totalorder 0, %s208
          %s213 = smul.addr %s26, 3
          %s214 = sadd.s32 %s204, %s213
          %s215 = smul.addr %s214, 128
          %s216 = scalar_lea.hbm %s0, %s215
          %s217 = smul.u32 8, %s207
          %s218 = sshll.u32 %s203, 4
          %s219 = int_to_ptr.vmem [resolvable:$true] %s218
          %s220 = sshll.u32 %s217, 4
          %224 = dma.hbm_to_vmem [thread:$0]  (%p212), %s216, %s220, %s219, %s200, 128, 128, 8
        $region28: #{tpu_custom_call.1} parent=23 // pred_fallthru
          _
        // Predicated region
        $region29: #{tpu_custom_call.1} parent=23 // pred_check
          %p225 = pneg %p85
        $region30: #{tpu_custom_call.1} parent=23 // pred_check_branch
          %227 = sbr.rel (%p225) target = $region32
        $region31: #{tpu_custom_call.1} parent=23 // pred_region
          %s228 = sand.u32 %s19, 1
          %s229 = scalar_lea.sflag [#allocation7], %s228
          %s230 = sand.u32 %s75, 1
          %s231 = smul.addr %s230, 8
          %s232 = scalar_lea.vmem [#allocation6], %s231
          %s233 = sadd.s32 %s27, 1
          %s234 = smul.u32 %s233, 2
          %s236 = ssub.s32 128, 128
          %237 = vsyncadd %s229, %s236
          %s238 = smul.addr %s26, 3
          %s239 = sadd.s32 %s234, %s238
          %s240 = smul.addr %s239, 128
          %s241 = scalar_lea.hbm %s1, %s240
          %s243 = sshll.u32 %s232, 4
          %s244 = int_to_ptr.vmem [resolvable:$true] %s243
          %246 = dma.hbm_to_vmem [thread:$0]  %s241, 128, %s244, %s229
        $region32: #{tpu_custom_call.1} parent=23 // pred_fallthru
          _
      $region24: #{tpu_custom_call.1} parent=5 // pred_fallthru
        _
      %p247 = scmp.le.s32.totalorder 1, %s19
      %p248 = scmp.lt.s32.totalorder %s19, 3
      %p249 = pnand %p247, %p248
      %p250 = pneg %p249
      // Predicated region
      $region33: #{tpu_custom_call.1} parent=5 // pred_check
        _
      $region34: #{tpu_custom_call.1} parent=5 // pred_check_branch
        %252 = sbr.rel (%p249) target = $region36
      $region35: #{tpu_custom_call.1} parent=5 // pred_region
        %s253 = ssub.s32 %s19, 1
        %s254 = sand.u32 %s46, 1
        %s255 = scalar_lea.sflag [#allocation4], %s254
        %s256 = sand.u32 %s46, 1
        %s257 = smul.addr %s256, 16
        %s258 = scalar_lea.vmem [#allocation3], %s257
        // Predicated region
        $region37: #{tpu_custom_call.1} parent=35 // pred_check
          %p259 = pneg %p59
        $region38: #{tpu_custom_call.1} parent=35 // pred_check_branch
          %261 = sbr.rel (%p259) target = $region40
        $region39: #{tpu_custom_call.1} parent=35 // pred_region
          %262 = dma.done %s255, 256
        $region40: #{tpu_custom_call.1} parent=35 // pred_fallthru
          _
        %s263 = sand.u32 %s24, 1
        %s264 = scalar_lea.sflag [#allocation7], %s263
        %s265 = sand.u32 %s78, 1
        %s266 = smul.addr %s265, 8
        %s267 = scalar_lea.vmem [#allocation6], %s266
        // Predicated region
        $region41: #{tpu_custom_call.1} parent=35 // pred_check
          %p268 = pneg %p91
        $region42: #{tpu_custom_call.1} parent=35 // pred_check_branch
          %270 = sbr.rel (%p268) target = $region44
        $region43: #{tpu_custom_call.1} parent=35 // pred_region
          %271 = dma.done %s264, 128
        $region44: #{tpu_custom_call.1} parent=35 // pred_fallthru
          _
        // Predicated region
        $region45: #{tpu_custom_call.1} parent=35 // pred_check
          %p272 = pneg %p112
        $region46: #{tpu_custom_call.1} parent=35 // pred_check_branch
          %274 = sbr.rel (%p272) target = $region48
        $region47: #{tpu_custom_call.1} parent=35 // pred_region
          %275 = dma.done [#allocation7], 6144
        $region48: #{tpu_custom_call.1} parent=35 // pred_fallthru
          _
        %s276 = sand.u32 %s46, 1
        %s277 = scalar_lea.sflag [#allocation4], %s276
        %s278 = sand.u32 %s46, 1
        %s279 = smul.addr %s278, 16
        %s280 = scalar_lea.vmem [#allocation3], %s279
        %p281 = pneg %p59
        %p282 = pneg %p56
        %s283 = sand.u32 %s24, 1
        %s284 = scalar_lea.sflag [#allocation7], %s283
        %s285 = sand.u32 %s78, 1
        %s286 = smul.addr %s285, 8
        %s287 = scalar_lea.vmem [#allocation6], %s286
        %p288 = pneg %p91
        %p289 = pneg %p88
        %p290 = pneg %p112
        %p291 = pneg %p109
        %p292 = pneg %p133
        %p293 = pneg %p130
        %p294 = pneg %p161
        %p295 = pneg %p158
        %s296 = sand.u32 %s148, 1
        %s297 = scalar_lea.sflag [#allocation5], %s296
        %s298 = sand.u32 %s148, 1
        %s299 = smul.addr %s298, 16
        %s300 = scalar_lea.vmem [#allocation9], %s299
        %s301 = smul.u32 2, %s29
        %s302 = ssub.s32 3, %s301
        %p303 = scmp.lt.s32.totalorder %s302, 2
        %s304 = scalar_select %p303, %s302, 2
        %s305 = smul.u32 128, %s304
        %s306 = sadd.s32 %s29, 1
        %s307 = smul.u32 %s306, 2
        %s308 = smul.u32 2, %s29
        %v309 = vld [vmem:[%s258] sm:$0xff]
        %v310 = vld [vmem:[%s258 + $0x8] sm:$0xff]
        %311 = vst [vmem:[#allocation2] sm:$0xff] %v309
        %312 = vst [vmem:[#allocation2 + $0x8] sm:$0xff] %v310
        %v313 = vld [vmem:[%s267] sm:$0xff]
        %314 = vst [vmem:[#allocation2 + $0x10] sm:$0xff] %v313
        %v315 = vld [vmem:[#allocation2] sm:$0xff]
        %v316 = vld [vmem:[#allocation2 + $0x8] sm:$0xff]
        %v317 = vld [vmem:[#allocation8] sm:$0xff]
        %v318 = vld [vmem:[#allocation8 + $0x8] sm:$0xff]
        %v319 = vld [vmem:[#allocation8 + $0x10] sm:$0xff]
        %v320 = vld [vmem:[#allocation8 + $0x18] sm:$0xff]
        %v321 = vld [vmem:[#allocation8 + $0x20] sm:$0xff]
        %v322 = vld [vmem:[#allocation8 + $0x28] sm:$0xff]
        %v323 = vld [vmem:[#allocation8 + $0x30] sm:$0xff]
        %v324 = vld [vmem:[#allocation8 + $0x38] sm:$0xff]
        %v325 = vld [vmem:[#allocation8 + $0x40] sm:$0xff]
        %v326 = vld [vmem:[#allocation8 + $0x48] sm:$0xff]
        %v327 = vld [vmem:[#allocation8 + $0x50] sm:$0xff]
        %v328 = vld [vmem:[#allocation8 + $0x58] sm:$0xff]
        %v329 = vld [vmem:[#allocation8 + $0x60] sm:$0xff]
        %v330 = vld [vmem:[#allocation8 + $0x68] sm:$0xff]
        %v331 = vld [vmem:[#allocation8 + $0x70] sm:$0xff]
        %v332 = vld [vmem:[#allocation8 + $0x78] sm:$0xff]
        %v333 = vld [vmem:[%s3] sm:$0x1]
        %v335 = vlaneseq
        %v336 = vshrl.u32 %v335, 7
        %v337 = vsub.s32 0, %v336
        %v338 = vrot.slane %v333, %v337
        %340 = vmatprep.subr.mxu0 0.0
        %341 = vmatpush1.msra.mxu0 %v332
        %342 = vmatprep.subr.mxu0 0.0
        %343 = vmatpush1.msra.mxu0 %v331
        %344 = vmatprep.subr.mxu0 0.0
        %345 = vmatpush1.msra.mxu0 %v330
        %346 = vmatprep.subr.mxu0 0.0
        %347 = vmatpush1.msra.mxu0 %v329
        %348 = vmatprep.subr.mxu0 0.0
        %349 = vmatpush1.msra.mxu0 %v328
        %350 = vmatprep.subr.mxu0 0.0
        %351 = vmatpush1.msra.mxu0 %v327
        %352 = vmatprep.subr.mxu0 0.0
        %353 = vmatpush1.msra.mxu0 %v326
        %354 = vmatprep.subr.mxu0 0.0
        %355 = vmatpush1.msra.mxu0 %v325
        %356 = vmatprep.subr.mxu0 0.0
        %357 = vmatpush1.msra.mxu0 %v324
        %358 = vmatprep.subr.mxu0 0.0
        %359 = vmatpush1.msra.mxu0 %v323
        %360 = vmatprep.subr.mxu0 0.0
        %361 = vmatpush1.msra.mxu0 %v322
        %362 = vmatprep.subr.mxu0 0.0
        %363 = vmatpush1.msra.mxu0 %v321
        %364 = vmatprep.subr.mxu0 0.0
        %365 = vmatpush1.msra.mxu0 %v320
        %366 = vmatprep.subr.mxu0 0.0
        %367 = vmatpush1.msra.mxu0 %v319
        %368 = vmatprep.subr.mxu0 0.0
        %369 = vmatpush1.msra.mxu0 %v318
        %370 = vmatprep.subr.mxu0 0.0
        %371 = vmatpush1.msra.mxu0 %v317
        %372 = vmatprep.subr.mxu0 0.0
        %373 = vmatpush2.msra.mxu0 0.0
        %374 = vmatprep.subr.mxu0 0.0
        %375 = vmatpush2.msra.mxu0 0.0
        %376 = vmatprep.subr.mxu0 0.0
        %377 = vmatpush2.msra.mxu0 0.0
        %378 = vmatprep.subr.mxu0 0.0
        %379 = vmatpush2.msra.mxu0 0.0
        %380 = vmatprep.subr.mxu0 0.0
        %381 = vmatpush2.msra.mxu0 0.0
        %382 = vmatprep.subr.mxu0 0.0
        %383 = vmatpush2.msra.mxu0 0.0
        %384 = vmatprep.subr.mxu0 0.0
        %385 = vmatpush2.msra.mxu0 0.0
        %386 = vmatprep.subr.mxu0 0.0
        %387 = vmatpush2.msra.mxu0 0.0
        %388 = vmatprep.subr.mxu0 0.0
        %389 = vmatpush2.msra.mxu0 0.0
        %390 = vmatprep.subr.mxu0 0.0
        %391 = vmatpush2.msra.mxu0 0.0
        %392 = vmatprep.subr.mxu0 0.0
        %393 = vmatpush2.msra.mxu0 0.0
        %394 = vmatprep.subr.mxu0 0.0
        %395 = vmatpush2.msra.mxu0 0.0
        %396 = vmatprep.subr.mxu0 0.0
        %397 = vmatpush2.msra.mxu0 0.0
        %398 = vmatprep.subr.mxu0 0.0
        %399 = vmatpush2.msra.mxu0 0.0
        %400 = vmatprep.subr.mxu0 0.0
        %401 = vmatpush2.msra.mxu0 0.0
        %402 = vmatprep.subr.mxu0 0.0
        %403 = vmatpush2.msra.mxu0 0.0
        %404 = vmatprep.mubr.f32.mxu0 0.0
        %405 = vmatmul.mubr.f32.gmra.mxu0 %v315
        %v406 = vpop.f32.mrf.mxu0
        %v407 = vadd.f32 %v338, %v406
        %v408 = vpop.f32.mrf.mxu0
        %409 = vmatprep.mubr.f32.mxu0 0.0
        %410 = vmatmul.mubr.f32.gmra.mxu0 %v316
        %v411 = vpop.f32.mrf.mxu0
        %v412 = vadd.f32 %v338, %v411
        %v413 = vpop.f32.mrf.mxu0
        %414 = vdwg.mxu0
        %415 = vst [vmem:[%s300] sm:$0xff] %v407
        %416 = vst [vmem:[%s300 + $0x8] sm:$0xff] %v412
        %v417 = vld [vmem:[%s300] sm:$0xff]
        %v418 = vld [vmem:[%s300 + $0x8] sm:$0xff]
        %v419 = vld [vmem:[#allocation2 + $0x1] sm:$0xff]
        %v420 = vld [vmem:[#allocation2 + $0x9] sm:$0xff]
        %s421 = scalar_lea.vmem [#allocation8], 128
        %v422 = vld [vmem:[%s421] sm:$0xff]
        %v423 = vld [vmem:[%s421 + $0x8] sm:$0xff]
        %v424 = vld [vmem:[%s421 + $0x10] sm:$0xff]
        %v425 = vld [vmem:[%s421 + $0x18] sm:$0xff]
        %v426 = vld [vmem:[%s421 + $0x20] sm:$0xff]
        %v427 = vld [vmem:[%s421 + $0x28] sm:$0xff]
        %v428 = vld [vmem:[%s421 + $0x30] sm:$0xff]
        %v429 = vld [vmem:[%s421 + $0x38] sm:$0xff]
        %v430 = vld [vmem:[%s421 + $0x40] sm:$0xff]
        %v431 = vld [vmem:[%s421 + $0x48] sm:$0xff]
        %v432 = vld [vmem:[%s421 + $0x50] sm:$0xff]
        %v433 = vld [vmem:[%s421 + $0x58] sm:$0xff]
        %v434 = vld [vmem:[%s421 + $0x60] sm:$0xff]
        %v435 = vld [vmem:[%s421 + $0x68] sm:$0xff]
        %v436 = vld [vmem:[%s421 + $0x70] sm:$0xff]
        %v437 = vld [vmem:[%s421 + $0x78] sm:$0xff]
        %438 = vmatprep.subr.mxu0 0.0
        %439 = vmatpush1.msra.mxu0 %v437
        %440 = vmatprep.subr.mxu0 0.0
        %441 = vmatpush1.msra.mxu0 %v436
        %442 = vmatprep.subr.mxu0 0.0
        %443 = vmatpush1.msra.mxu0 %v435
        %444 = vmatprep.subr.mxu0 0.0
        %445 = vmatpush1.msra.mxu0 %v434
        %446 = vmatprep.subr.mxu0 0.0
        %447 = vmatpush1.msra.mxu0 %v433
        %448 = vmatprep.subr.mxu0 0.0
        %449 = vmatpush1.msra.mxu0 %v432
        %450 = vmatprep.subr.mxu0 0.0
        %451 = vmatpush1.msra.mxu0 %v431
        %452 = vmatprep.subr.mxu0 0.0
        %453 = vmatpush1.msra.mxu0 %v430
        %454 = vmatprep.subr.mxu0 0.0
        %455 = vmatpush1.msra.mxu0 %v429
        %456 = vmatprep.subr.mxu0 0.0
        %457 = vmatpush1.msra.mxu0 %v428
        %458 = vmatprep.subr.mxu0 0.0
        %459 = vmatpush1.msra.mxu0 %v427
        %460 = vmatprep.subr.mxu0 0.0
        %461 = vmatpush1.msra.mxu0 %v426
        %462 = vmatprep.subr.mxu0 0.0
        %463 = vmatpush1.msra.mxu0 %v425
        %464 = vmatprep.subr.mxu0 0.0
        %465 = vmatpush1.msra.mxu0 %v424
        %466 = vmatprep.subr.mxu0 0.0
        %467 = vmatpush1.msra.mxu0 %v423
        %468 = vmatprep.subr.mxu0 0.0
        %469 = vmatpush1.msra.mxu0 %v422
        %470 = vmatprep.subr.mxu0 0.0
        %471 = vmatpush2.msra.mxu0 0.0
        %472 = vmatprep.subr.mxu0 0.0
        %473 = vmatpush2.msra.mxu0 0.0
        %474 = vmatprep.subr.mxu0 0.0
        %475 = vmatpush2.msra.mxu0 0.0
        %476 = vmatprep.subr.mxu0 0.0
        %477 = vmatpush2.msra.mxu0 0.0
        %478 = vmatprep.subr.mxu0 0.0
        %479 = vmatpush2.msra.mxu0 0.0
        %480 = vmatprep.subr.mxu0 0.0
        %481 = vmatpush2.msra.mxu0 0.0
        %482 = vmatprep.subr.mxu0 0.0
        %483 = vmatpush2.msra.mxu0 0.0
        %484 = vmatprep.subr.mxu0 0.0
        %485 = vmatpush2.msra.mxu0 0.0
        %486 = vmatprep.subr.mxu0 0.0
        %487 = vmatpush2.msra.mxu0 0.0
        %488 = vmatprep.subr.mxu0 0.0
        %489 = vmatpush2.msra.mxu0 0.0
        %490 = vmatprep.subr.mxu0 0.0
        %491 = vmatpush2.msra.mxu0 0.0
        %492 = vmatprep.subr.mxu0 0.0
        %493 = vmatpush2.msra.mxu0 0.0
        %494 = vmatprep.subr.mxu0 0.0
        %495 = vmatpush2.msra.mxu0 0.0
        %496 = vmatprep.subr.mxu0 0.0
        %497 = vmatpush2.msra.mxu0 0.0
        %498 = vmatprep.subr.mxu0 0.0
        %499 = vmatpush2.msra.mxu0 0.0
        %500 = vmatprep.subr.mxu0 0.0
        %501 = vmatpush2.msra.mxu0 0.0
        %502 = vmatprep.mubr.f32.mxu0 0.0
        %503 = vmatmul.mubr.f32.gmra.mxu0 %v419
        %v504 = vpop.f32.mrf.mxu0
        %v505 = vadd.f32 0.0, %v504
        %v506 = vpop.f32.mrf.mxu0
        %507 = vmatprep.mubr.f32.mxu0 0.0
        %508 = vmatmul.mubr.f32.gmra.mxu0 %v420
        %v509 = vpop.f32.mrf.mxu0
        %v510 = vadd.f32 0.0, %v509
        %v511 = vpop.f32.mrf.mxu0
        %512 = vdwg.mxu0
        %v513 = vadd.f32 %v417, %v505
        %v514 = vadd.f32 %v418, %v510
        %515 = vst [vmem:[%s300] sm:$0xff] %v513
        %516 = vst [vmem:[%s300 + $0x8] sm:$0xff] %v514
        %v517 = vld [vmem:[%s300] sm:$0xff]
        %v518 = vld [vmem:[%s300 + $0x8] sm:$0xff]
        %v519 = vld [vmem:[#allocation2 + $0x2] sm:$0xff]
        %v520 = vld [vmem:[#allocation2 + $0xa] sm:$0xff]
        %s521 = scalar_lea.vmem [#allocation8], 256
        %v522 = vld [vmem:[%s521] sm:$0xff]
        %v523 = vld [vmem:[%s521 + $0x8] sm:$0xff]
        %v524 = vld [vmem:[%s521 + $0x10] sm:$0xff]
        %v525 = vld [vmem:[%s521 + $0x18] sm:$0xff]
        %v526 = vld [vmem:[%s521 + $0x20] sm:$0xff]
        %v527 = vld [vmem:[%s521 + $0x28] sm:$0xff]
        %v528 = vld [vmem:[%s521 + $0x30] sm:$0xff]
        %v529 = vld [vmem:[%s521 + $0x38] sm:$0xff]
        %v530 = vld [vmem:[%s521 + $0x40] sm:$0xff]
        %v531 = vld [vmem:[%s521 + $0x48] sm:$0xff]
        %v532 = vld [vmem:[%s521 + $0x50] sm:$0xff]
        %v533 = vld [vmem:[%s521 + $0x58] sm:$0xff]
        %v534 = vld [vmem:[%s521 + $0x60] sm:$0xff]
        %v535 = vld [vmem:[%s521 + $0x68] sm:$0xff]
        %v536 = vld [vmem:[%s521 + $0x70] sm:$0xff]
        %v537 = vld [vmem:[%s521 + $0x78] sm:$0xff]
        %538 = vmatprep.subr.mxu0 0.0
        %539 = vmatpush1.msra.mxu0 %v537
        %540 = vmatprep.subr.mxu0 0.0
        %541 = vmatpush1.msra.mxu0 %v536
        %542 = vmatprep.subr.mxu0 0.0
        %543 = vmatpush1.msra.mxu0 %v535
        %544 = vmatprep.subr.mxu0 0.0
        %545 = vmatpush1.msra.mxu0 %v534
        %546 = vmatprep.subr.mxu0 0.0
        %547 = vmatpush1.msra.mxu0 %v533
        %548 = vmatprep.subr.mxu0 0.0
        %549 = vmatpush1.msra.mxu0 %v532
        %550 = vmatprep.subr.mxu0 0.0
        %551 = vmatpush1.msra.mxu0 %v531
        %552 = vmatprep.subr.mxu0 0.0
        %553 = vmatpush1.msra.mxu0 %v530
        %554 = vmatprep.subr.mxu0 0.0
        %555 = vmatpush1.msra.mxu0 %v529
        %556 = vmatprep.subr.mxu0 0.0
        %557 = vmatpush1.msra.mxu0 %v528
        %558 = vmatprep.subr.mxu0 0.0
        %559 = vmatpush1.msra.mxu0 %v527
        %560 = vmatprep.subr.mxu0 0.0
        %561 = vmatpush1.msra.mxu0 %v526
        %562 = vmatprep.subr.mxu0 0.0
        %563 = vmatpush1.msra.mxu0 %v525
        %564 = vmatprep.subr.mxu0 0.0
        %565 = vmatpush1.msra.mxu0 %v524
        %566 = vmatprep.subr.mxu0 0.0
        %567 = vmatpush1.msra.mxu0 %v523
        %568 = vmatprep.subr.mxu0 0.0
        %569 = vmatpush1.msra.mxu0 %v522
        %570 = vmatprep.subr.mxu0 0.0
        %571 = vmatpush2.msra.mxu0 0.0
        %572 = vmatprep.subr.mxu0 0.0
        %573 = vmatpush2.msra.mxu0 0.0
        %574 = vmatprep.subr.mxu0 0.0
        %575 = vmatpush2.msra.mxu0 0.0
        %576 = vmatprep.subr.mxu0 0.0
        %577 = vmatpush2.msra.mxu0 0.0
        %578 = vmatprep.subr.mxu0 0.0
        %579 = vmatpush2.msra.mxu0 0.0
        %580 = vmatprep.subr.mxu0 0.0
        %581 = vmatpush2.msra.mxu0 0.0
        %582 = vmatprep.subr.mxu0 0.0
        %583 = vmatpush2.msra.mxu0 0.0
        %584 = vmatprep.subr.mxu0 0.0
        %585 = vmatpush2.msra.mxu0 0.0
        %586 = vmatprep.subr.mxu0 0.0
        %587 = vmatpush2.msra.mxu0 0.0
        %588 = vmatprep.subr.mxu0 0.0
        %589 = vmatpush2.msra.mxu0 0.0
        %590 = vmatprep.subr.mxu0 0.0
        %591 = vmatpush2.msra.mxu0 0.0
        %592 = vmatprep.subr.mxu0 0.0
        %593 = vmatpush2.msra.mxu0 0.0
        %594 = vmatprep.subr.mxu0 0.0
        %595 = vmatpush2.msra.mxu0 0.0
        %596 = vmatprep.subr.mxu0 0.0
        %597 = vmatpush2.msra.mxu0 0.0
        %598 = vmatprep.subr.mxu0 0.0
        %599 = vmatpush2.msra.mxu0 0.0
        %600 = vmatprep.subr.mxu0 0.0
        %601 = vmatpush2.msra.mxu0 0.0
        %602 = vmatprep.mubr.f32.mxu0 0.0
        %603 = vmatmul.mubr.f32.gmra.mxu0 %v519
        %v604 = vpop.f32.mrf.mxu0
        %v605 = vadd.f32 0.0, %v604
        %v606 = vpop.f32.mrf.mxu0
        %607 = vmatprep.mubr.f32.mxu0 0.0
        %608 = vmatmul.mubr.f32.gmra.mxu0 %v520
        %v609 = vpop.f32.mrf.mxu0
        %v610 = vadd.f32 0.0, %v609
        %v611 = vpop.f32.mrf.mxu0
        %612 = vdwg.mxu0
        %v613 = vadd.f32 %v517, %v605
        %v614 = vadd.f32 %v518, %v610
        %615 = vst [vmem:[%s300] sm:$0xff] %v613
        %616 = vst [vmem:[%s300 + $0x8] sm:$0xff] %v614
        %s617 = sand.u32 %s148, 1
        %s618 = scalar_lea.sflag [#allocation5], %s617
        %s619 = sand.u32 %s148, 1
        %s620 = smul.addr %s619, 16
        %s621 = scalar_lea.vmem [#allocation9], %s620
        // Predicated region
        $region49: #{tpu_custom_call.1} parent=35 // pred_check
          %p622 = pneg %p158
        $region50: #{tpu_custom_call.1} parent=35 // pred_check_branch
          %624 = sbr.rel (%p622) target = $region52
        $region51: #{tpu_custom_call.1} parent=35 // pred_region
          %s625 = smul.u32 2, %s29
          %s627 = ssub.s32 256, 256
          %628 = vsyncadd %s618, %s627
          %s629 = smul.addr %s28, 2
          %s630 = sadd.s32 %s625, %s629
          %s631 = smul.addr %s630, 128
          %s632 = scalar_lea.hbm %s4, %s631
          %s633 = sshll.u32 %s621, 4
          %s634 = int_to_ptr.vmem [resolvable:$true] %s633
          %639 = dma.vmem_to_hbm [thread:$0]  %s634, 256, %s632, %s618, 128, 128, 8
        $region52: #{tpu_custom_call.1} parent=35 // pred_fallthru
          _
      $region36: #{tpu_custom_call.1} parent=5 // pred_fallthru
        _
      %p640 = scmp.le.s32.totalorder 2, %s19
      // Predicated region
      $region53: #{tpu_custom_call.1} parent=5 // pred_check
        %p641 = pneg %p640
      $region54: #{tpu_custom_call.1} parent=5 // pred_check_branch
        %643 = sbr.rel (%p641) target = $region56
      $region55: #{tpu_custom_call.1} parent=5 // pred_region
        %s644 = ssub.s32 %s19, 2
        // Predicated region
        $region57: #{tpu_custom_call.1} parent=55 // pred_check
          %p645 = pneg %p164
        $region58: #{tpu_custom_call.1} parent=55 // pred_check_branch
          %647 = sbr.rel (%p645) target = $region60
        $region59: #{tpu_custom_call.1} parent=55 // pred_region
          %s648 = sand.u32 %s149, 1
          %s649 = scalar_lea.sflag [#allocation5], %s648
          %s650 = sand.u32 %s149, 1
          %s651 = smul.addr %s650, 16
          %s652 = scalar_lea.vmem [#allocation9], %s651
          %653 = dma.done %s649, 256
        $region60: #{tpu_custom_call.1} parent=55 // pred_fallthru
          _
      $region56: #{tpu_custom_call.1} parent=5 // pred_fallthru
        _
    $region6: #{tpu_custom_call.1} parent=1 // loop_footer
      %s23 = sadd.s32 1, %s19
    $region7: #{tpu_custom_call.1} parent=1 // loop_footer_branch
      %18 = sbr.rel target = $region3
    $region8: #{tpu_custom_call.1} parent=1 // loop_exit
      _
    %654 = vsyncpa [#allocation4], 1
    %s655 = scalar_lea.sflag [#allocation4], 1
    %656 = vsyncpa %s655, 1
    %657 = vsyncpa [#allocation7], 1
    %s658 = scalar_lea.sflag [#allocation7], 1
    %659 = vsyncpa %s658, 1
    %660 = vsyncpa [#allocation5], 1
    %s661 = scalar_lea.sflag [#allocation5], 1
    %662 = vsyncpa %s661, 1

</llo_original>
